<compile_context>
chip_gen: v6e
topology: v6e:2x2x1
jax: 0.10.0
libtpu: 0.0.40
codegen_flags: <defaults>
</compile_context>

<pallas_src>
import functools

import jax
import jax.numpy as jnp
from jax.experimental import pallas as pl
from jax.experimental.pallas import tpu as pltpu


def _round_up(x, m):
    return ((x + m - 1) // m) * m


def self_attention_kernel(x_ref, w_ref, b_ref, o_ref,
                          q_bf, k_bf, v_bf,
                          *, cq_p, c_p, c_out, n_real, n_pad, tile_n):
    j = pl.program_id(1)

    # Fused projection (q | k | v) once per batch element; persist the bf16
    # MXU operands in scratch and reuse them for every column tile j.
    @pl.when(j == 0)
    def _():
        x = x_ref[...]                                                   # (C, Np) f32
        qkv = jnp.dot(w_ref[...], x,
                      preferred_element_type=jnp.float32) + b_ref[...]  # (R, Np) f32
        q_bf[...] = qkv[0:cq_p].astype(jnp.bfloat16)
        k_bf[...] = qkv[cq_p:2 * cq_p].astype(jnp.bfloat16)
        v_bf[...] = qkv[2 * cq_p:2 * cq_p + c_p].astype(jnp.bfloat16)

    col = pl.multiple_of(j * tile_n, 128)
    x_cols = x_ref[:, pl.ds(col, tile_n)]                # (C, Tn)   f32
    k_cols = k_bf[:, pl.ds(col, tile_n)]                 # (Cq_p, Tn) bf16

    # qk[i, t] = sum_c q[c, i] * k[c, t]: contract axis 0 of both operands on
    # the MXU (bf16 in, f32 accumulate) -- no transposed relayout.
    qk = jax.lax.dot_general(
        q_bf[...], k_cols,
        dimension_numbers=(((0,), (0,)), ((), ())),
        preferred_element_type=jnp.float32)              # (Np, Tn) f32

    # F.softmax(query_key, dim=1): softmax over the first N axis (per column).
    m = jnp.max(qk, axis=0, keepdims=True)               # (1, Tn)
    e = jnp.exp(qk - m)                                   # (Np, Tn) f32
    if n_real != n_pad:
        # Zero the padded rows with a tiny (Np, 1) iota broadcast (single
        # select pass) so they drop out of both the sum and the value matmul.
        row_ids = jax.lax.broadcasted_iota(jnp.int32, (n_pad, 1), 0)
        e = jnp.where(row_ids < n_real, e, 0.0)
    s = jnp.sum(e, axis=0, keepdims=True)                 # (1, Tn)

    # torch.bmm(value, attn) on the un-normalized weights; normalize the small
    # (C, Tn) result on the EUP and gate by the input.
    out_un = jnp.dot(v_bf[...], e.astype(jnp.bfloat16),
                     preferred_element_type=jnp.float32)  # (C_p, Tn) f32
    if c_p != c_out:
        out_un = out_un[0:c_out]
    o_ref[...] = out_un * pl.reciprocal(s, approx=True) * x_cols


def _vmem_capacity_bytes():
    try:
        info = pltpu.get_tpu_info()
        cap = getattr(info, "vmem_capacity_bytes", None)
        if cap:
            return int(cap)
    except Exception:
        pass
    return 64 * 2**20   # conservative fallback: v7x-sized VMEM


def _pick_tile_n(n_pad, c, cq_p, c_p, budget):
    """Largest multiple of 128 that divides n_pad and keeps live VMEM in budget."""
    r = 2 * cq_p + c_p
    fixed = (2 * c * n_pad * 4                 # double-buffered x block (f32)
             + (2 * cq_p + c_p) * n_pad * 2    # persisted bf16 q/k/v scratch
             + 2 * 4 * (r * c + r))            # stacked W + bias (x2 buffers)
    best = 128
    for mult in range(n_pad // 128, 0, -1):
        t = mult * 128
        if n_pad % t:
            continue
        live = 16 * n_pad * t + 2 * c * t * 4  # qk/e/e_bf16 temps + out block
        if fixed + live <= budget:
            best = t
            break
    return best


def self_attention(x, wq, bq, wk, bk, wv, bv, *, tile_n=None):
    """x: (B, C, H, W) f32. Returns (B, C, H, W) f32."""
    B, C, H, W = x.shape
    N = H * W
    Cq = wq.shape[0]

    # Pad the flattened spatial dim to a lane-dense multiple of 128.
    n_pad = _round_up(N, 128)
    xf = x.reshape(B, C, N)
    if n_pad != N:
        xf = jnp.pad(xf, ((0, 0), (0, 0), (0, n_pad - N)))

    # Stack [Wq; Wk; Wv] into one projection weight.  Sections are padded to
    # 16-row boundaries so the in-kernel row slices are tile-aligned; the zero
    # rows contribute nothing to the contractions.
    cq_p = _round_up(Cq, 16)
    c_p = _round_up(C, 16)
    R = 2 * cq_p + c_p
    w_st = jnp.zeros((R, C), jnp.float32)
    w_st = w_st.at[0:Cq].set(wq.astype(jnp.float32))
    w_st = w_st.at[cq_p:cq_p + Cq].set(wk.astype(jnp.float32))
    w_st = w_st.at[2 * cq_p:2 * cq_p + C].set(wv.astype(jnp.float32))
    b_st = jnp.zeros((R, 1), jnp.float32)
    b_st = b_st.at[0:Cq, 0].set(bq.astype(jnp.float32))
    b_st = b_st.at[cq_p:cq_p + Cq, 0].set(bk.astype(jnp.float32))
    b_st = b_st.at[2 * cq_p:2 * cq_p + C, 0].set(bv.astype(jnp.float32))

    # Generation-aware tiling: bound the live VMEM to a fraction of this
    # chip's capacity (v7x: 64 MiB; v5e/v6e: 128 MiB -> column tiling usually
    # collapses entirely for the N this module targets).
    vmem_cap = _vmem_capacity_bytes()
    budget = int(0.55 * vmem_cap)
    if tile_n is None:
        tile_n = _pick_tile_n(n_pad, C, cq_p, c_p, budget)
    n_tiles = n_pad // tile_n

    kernel = functools.partial(
        self_attention_kernel,
        cq_p=cq_p, c_p=c_p, c_out=C, n_real=N, n_pad=n_pad, tile_n=tile_n)

    est = (2 * C * n_pad * 4                  # x block (x2 buffers)
           + (2 * cq_p + c_p) * n_pad * 2     # bf16 q/k/v scratch
           + 2 * C * tile_n * 4               # out block (x2 buffers)
           + 16 * n_pad * tile_n              # qk / e / e_bf16 temps
           + R * n_pad * 4                    # qkv f32 at j == 0
           + 2 * 4 * (R * C + R))             # weights + bias
    vmem_limit = int(min(max(2 * est, 32 * 2**20), int(0.9 * vmem_cap)))

    cost = pl.CostEstimate(
        flops=B * (2 * R * C * n_pad                 # fused projection (once/batch)
                   + 2 * cq_p * n_pad * n_pad        # q^T k
                   + 2 * c_p * n_pad * n_pad         # v @ attn
                   + 4 * C * n_pad),                 # normalize + gate
        transcendentals=B * n_pad * n_pad,
        bytes_accessed=2 * B * C * n_pad * 4 + 4 * (R * C + R),
    )

    out_flat = pl.pallas_call(
        kernel,
        out_shape=jax.ShapeDtypeStruct((B, C, n_pad), jnp.float32),
        grid_spec=pltpu.PrefetchScalarGridSpec(
            num_scalar_prefetch=0,
            grid=(B, n_tiles),
            in_specs=[
                pl.BlockSpec((None, C, n_pad), lambda b, j: (b, 0, 0)),  # x (full row)
                pl.BlockSpec((R, C), lambda b, j: (0, 0)),               # stacked W
                pl.BlockSpec((R, 1), lambda b, j: (0, 0)),               # stacked bias
            ],
            out_specs=pl.BlockSpec((None, C, tile_n), lambda b, j: (b, 0, j)),
            scratch_shapes=[
                pltpu.VMEM((cq_p, n_pad), jnp.bfloat16),   # q (persisted per batch)
                pltpu.VMEM((cq_p, n_pad), jnp.bfloat16),   # k
                pltpu.VMEM((c_p, n_pad), jnp.bfloat16),    # v
            ],
        ),
        compiler_params=pltpu.CompilerParams(
            dimension_semantics=("parallel", "arbitrary"),
            vmem_limit_bytes=vmem_limit),
        cost_estimate=cost,
    )(xf, w_st, b_st)

    return out_flat[:, :, :N].reshape(B, C, H, W)


def self_attention_ref(x, wq, bq, wk, bk, wv, bv):
    """Pure-JAX reference mirroring the PyTorch forward."""
    B, C, H, W = x.shape
    N = H * W
    xf = x.reshape(B, C, N)
    q = jnp.einsum('oc,bcn->bon', wq, xf) + bq[None, :, None]   # (B, Cq, N)
    k = jnp.einsum('oc,bcn->bon', wk, xf) + bk[None, :, None]   # (B, Cq, N)
    v = jnp.einsum('oc,bcn->bon', wv, xf) + bv[None, :, None]   # (B, C, N)
    qk = jnp.einsum('bci,bcj->bij', q, k)                       # (B, N, N)
    attn = jax.nn.softmax(qk, axis=1)
    out = jnp.einsum('bcn,bnm->bcm', v, attn)                   # (B, C, N)
    return out.reshape(B, C, H, W) * x


if __name__ == "__main__":
    # Small shapes consistent with the module: B=2, C=8 (so C//4=2), H=W=16 -> N=256.
    B, C, H, W = 2, 8, 16, 16
    Cq = C // 4

    key = jax.random.PRNGKey(0)
    kx, kq, kbq, kk, kbk, kv, kbv = jax.random.split(key, 7)

    x = jax.random.normal(kx, (B, C, H, W), dtype=jnp.float32)
    # Conv1d(kernel=1) weights: (out_ch, in_ch); biases: (out_ch,)
    wq = jax.random.normal(kq, (Cq, C), dtype=jnp.float32) * 0.1
    bq = jax.random.normal(kbq, (Cq,), dtype=jnp.float32) * 0.1
    wk = jax.random.normal(kk, (Cq, C), dtype=jnp.float32) * 0.1
    bk = jax.random.normal(kbk, (Cq,), dtype=jnp.float32) * 0.1
    wv = jax.random.normal(kv, (C, C), dtype=jnp.float32) * 0.1
    bv = jax.random.normal(kbv, (C,), dtype=jnp.float32) * 0.1

    out = self_attention(x, wq, bq, wk, bk, wv, bv)
    out = jax.block_until_ready(out)

    ref = self_attention_ref(x, wq, bq, wk, bk, wv, bv)
    assert out.shape == (B, C, H, W)
    assert jnp.allclose(out, ref, atol=2e-2, rtol=2e-2), "mismatch vs JAX reference"

    print("KERNEL_OK")
</pallas_src>

<mosaic_0001>
module attributes {stable_mosaic.version = 11 : i64} {
  func.func @self_attention_kernel(%arg0: i32, %arg1: i32, %arg2: memref<1x8x256xf32, #tpu.memory_space<vmem>>, %arg3: memref<48x8xf32, #tpu.memory_space<vmem>>, %arg4: memref<48x1xf32, #tpu.memory_space<vmem>>, %arg5: memref<1x8x256xf32, #tpu.memory_space<vmem>>, %arg6: memref<16x256xbf16, #tpu.memory_space<vmem>>, %arg7: memref<16x256xbf16, #tpu.memory_space<vmem>>, %arg8: memref<16x256xbf16, #tpu.memory_space<vmem>>) attributes {dimension_semantics = [#tpu.dimension_semantics<parallel>, #tpu.dimension_semantics<arbitrary>], iteration_bounds = array<i64: 2, 1>, scalar_prefetch = 0 : i64, scratch_operands = 3 : i64, tpu.core_type = #tpu.core_type<tc>, window_params = [{transform_indices = @transform_0, window_bounds = array<i64: 1, 8, 256>}, {pipeline_mode = #tpu.pipeline_mode<synchronous>, transform_indices = @transform_1, window_bounds = array<i64: 48, 8>}, {pipeline_mode = #tpu.pipeline_mode<synchronous>, transform_indices = @transform_2, window_bounds = array<i64: 48, 1>}, {transform_indices = @transform_3, window_bounds = array<i64: 1, 8, 256>}]} {
    %c0_i32 = arith.constant 0 : i32
    %0 = arith.cmpi eq, %arg1, %c0_i32 : i32
    %1 = arith.extui %0 : i1 to i32
    %c0_i32_0 = arith.constant 0 : i32
    %2 = arith.cmpi ne, %1, %c0_i32_0 : i32
    scf.if %2 {
      %c0_13 = arith.constant 0 : index
      %c0_14 = arith.constant 0 : index
      %c0_15 = arith.constant 0 : index
      %30 = vector.load %arg2[%c0_13, %c0_14, %c0_15] : memref<1x8x256xf32, #tpu.memory_space<vmem>>, vector<1x8x256xf32>
      %31 = vector.shape_cast %30 : vector<1x8x256xf32> to vector<8x256xf32>
      %c0_16 = arith.constant 0 : index
      %c0_17 = arith.constant 0 : index
      %32 = vector.load %arg3[%c0_16, %c0_17] : memref<48x8xf32, #tpu.memory_space<vmem>>, vector<48x8xf32>
      %cst_18 = arith.constant dense<0.000000e+00> : vector<48x256xf32>
      %33 = tpu.matmul %32, %31, %cst_18 {dimension_numbers = #tpu.dot_dimension_numbers<[1], [0], [0], [1], [0, 0, 1, 1], [], []>} : vector<48x8xf32>, vector<8x256xf32>, vector<48x256xf32> -> vector<48x256xf32>
      %c0_19 = arith.constant 0 : index
      %c0_20 = arith.constant 0 : index
      %34 = vector.load %arg4[%c0_19, %c0_20] : memref<48x1xf32, #tpu.memory_space<vmem>>, vector<48x1xf32>
      %35 = vector.broadcast %34 : vector<48x1xf32> to vector<48x256xf32>
      %36 = arith.addf %33, %35 : vector<48x256xf32>
      %37 = vector.extract_strided_slice %36 {offsets = [0, 0], sizes = [16, 256], strides = [1, 1]} : vector<48x256xf32> to vector<16x256xf32>
      %38 = arith.truncf %37 : vector<16x256xf32> to vector<16x256xbf16>
      %c0_21 = arith.constant 0 : index
      %c0_22 = arith.constant 0 : index
      %39 = vector.load %arg6[%c0_21, %c0_22] : memref<16x256xbf16, #tpu.memory_space<vmem>>, vector<16x256xbf16>
      tpu.vector_store %arg6[%c0_21, %c0_22], %38 {strides = array<i32>} : memref<16x256xbf16, #tpu.memory_space<vmem>>, vector<16x256xbf16>,
      %40 = vector.extract_strided_slice %36 {offsets = [16, 0], sizes = [16, 256], strides = [1, 1]} : vector<48x256xf32> to vector<16x256xf32>
      %41 = arith.truncf %40 : vector<16x256xf32> to vector<16x256xbf16>
      %c0_23 = arith.constant 0 : index
      %c0_24 = arith.constant 0 : index
      %42 = vector.load %arg7[%c0_23, %c0_24] : memref<16x256xbf16, #tpu.memory_space<vmem>>, vector<16x256xbf16>
      tpu.vector_store %arg7[%c0_23, %c0_24], %41 {strides = array<i32>} : memref<16x256xbf16, #tpu.memory_space<vmem>>, vector<16x256xbf16>,
      %43 = vector.extract_strided_slice %36 {offsets = [32, 0], sizes = [16, 256], strides = [1, 1]} : vector<48x256xf32> to vector<16x256xf32>
      %44 = arith.truncf %43 : vector<16x256xf32> to vector<16x256xbf16>
      %c0_25 = arith.constant 0 : index
      %c0_26 = arith.constant 0 : index
      %45 = vector.load %arg8[%c0_25, %c0_26] : memref<16x256xbf16, #tpu.memory_space<vmem>>, vector<16x256xbf16>
      tpu.vector_store %arg8[%c0_25, %c0_26], %44 {strides = array<i32>} : memref<16x256xbf16, #tpu.memory_space<vmem>>, vector<16x256xbf16>,
    } else {
    }
    %c256_i32 = arith.constant 256 : i32
    %3 = arith.muli %arg1, %c256_i32 : i32
    %4 = tpu.assume_multiple %3, 128 : i32
    %c0 = arith.constant 0 : index
    %c0_1 = arith.constant 0 : index
    %5 = arith.index_cast %4 : i32 to index
    %6 = vector.load %arg2[%c0, %c0_1, %5] : memref<1x8x256xf32, #tpu.memory_space<vmem>>, vector<1x8x256xf32>
    %7 = vector.shape_cast %6 : vector<1x8x256xf32> to vector<8x256xf32>
    %c0_2 = arith.constant 0 : index
    %8 = arith.index_cast %4 : i32 to index
    %9 = vector.load %arg7[%c0_2, %8] : memref<16x256xbf16, #tpu.memory_space<vmem>>, vector<16x256xbf16>
    %c0_3 = arith.constant 0 : index
    %c0_4 = arith.constant 0 : index
    %10 = vector.load %arg6[%c0_3, %c0_4] : memref<16x256xbf16, #tpu.memory_space<vmem>>, vector<16x256xbf16>
    %cst = arith.constant dense<0.000000e+00> : vector<256x256xf32>
    %11 = tpu.matmul %10, %9, %cst {dimension_numbers = #tpu.dot_dimension_numbers<[0], [0], [1], [1], [0, 1, 1, 1], [], []>} : vector<16x256xbf16>, vector<16x256xbf16>, vector<256x256xf32> -> vector<256x256xf32>
    %cst_5 = arith.constant dense<0xFF800000> : vector<256xf32>
    %12 = vector.multi_reduction <maximumf>, %11, %cst_5 [0] : vector<256x256xf32> to vector<256xf32>
    %13 = vector.shape_cast %12 : vector<256xf32> to vector<1x256xf32>
    %14 = vector.broadcast %13 : vector<1x256xf32> to vector<256x256xf32>
    %15 = arith.subf %11, %14 : vector<256x256xf32>
    %16 = math.exp %15 : vector<256x256xf32>
    %cst_6 = arith.constant dense<0.000000e+00> : vector<256xf32>
    %17 = vector.multi_reduction <add>, %16, %cst_6 [0] : vector<256x256xf32> to vector<256xf32>
    %18 = vector.shape_cast %17 : vector<256xf32> to vector<1x256xf32>
    %c0_7 = arith.constant 0 : index
    %c0_8 = arith.constant 0 : index
    %19 = vector.load %arg8[%c0_7, %c0_8] : memref<16x256xbf16, #tpu.memory_space<vmem>>, vector<16x256xbf16>
    %20 = arith.truncf %16 : vector<256x256xf32> to vector<256x256xbf16>
    %cst_9 = arith.constant dense<0.000000e+00> : vector<16x256xf32>
    %21 = tpu.matmul %19, %20, %cst_9 {dimension_numbers = #tpu.dot_dimension_numbers<[1], [0], [0], [1], [0, 0, 1, 1], [], []>} : vector<16x256xbf16>, vector<256x256xbf16>, vector<16x256xf32> -> vector<16x256xf32>
    %22 = vector.extract_strided_slice %21 {offsets = [0, 0], sizes = [8, 256], strides = [1, 1]} : vector<16x256xf32> to vector<8x256xf32>
    %23 = tpu.reciprocal %18 {approx = true} : vector<1x256xf32> -> vector<1x256xf32>
    %24 = vector.broadcast %23 : vector<1x256xf32> to vector<8x256xf32>
    %25 = arith.mulf %22, %24 : vector<8x256xf32>
    %26 = arith.mulf %25, %7 : vector<8x256xf32>
    %c0_10 = arith.constant 0 : index
    %c0_11 = arith.constant 0 : index
    %c0_12 = arith.constant 0 : index
    %27 = vector.load %arg5[%c0_10, %c0_11, %c0_12] : memref<1x8x256xf32, #tpu.memory_space<vmem>>, vector<1x8x256xf32>
    %28 = vector.shape_cast %27 : vector<1x8x256xf32> to vector<8x256xf32>
    %29 = vector.shape_cast %26 : vector<8x256xf32> to vector<1x8x256xf32>
    tpu.vector_store %arg5[%c0_10, %c0_11, %c0_12], %29 {strides = array<i32>} : memref<1x8x256xf32, #tpu.memory_space<vmem>>, vector<1x8x256xf32>,
    return
  }
  func.func @transform_0(%arg0: i32, %arg1: i32) -> (i32, i32, i32) {
    %c0_i32 = arith.constant 0 : i32
    %c0_i32_0 = arith.constant 0 : i32
    %c0_i32_1 = arith.constant 0 : i32
    return %arg0, %c0_i32, %c0_i32_0 : i32, i32, i32
  }
  func.func @transform_1(%arg0: i32, %arg1: i32) -> (i32, i32) {
    %c0_i32 = arith.constant 0 : i32
    %c0_i32_0 = arith.constant 0 : i32
    %c0_i32_1 = arith.constant 0 : i32
    return %c0_i32, %c0_i32_0 : i32, i32
  }
  func.func @transform_2(%arg0: i32, %arg1: i32) -> (i32, i32) {
    %c0_i32 = arith.constant 0 : i32
    %c0_i32_0 = arith.constant 0 : i32
    %c0_i32_1 = arith.constant 0 : i32
    return %c0_i32, %c0_i32_0 : i32, i32
  }
  func.func @transform_3(%arg0: i32, %arg1: i32) -> (i32, i32, i32) {
    %c0_i32 = arith.constant 0 : i32
    %c0_i32_0 = arith.constant 0 : i32
    return %arg0, %c0_i32, %arg1 : i32, i32, i32
  }
}

</mosaic_0001>

<llo_original>
// kernel: tpu_custom_call.1
$region0: #{tpu_custom_call.1}
  #allocation0 [shape = 'u32[]', space=smem, size = 0x4, offset = 0x4, fixed_abs, tag = 'smem constant byte address 0x4 - core index']
  #allocation1 [shape = 'u32[144,128]{1,0:T(1,128)}', space=vmem, size = 0x12000, scoped, tag = 'internal scratch']
  #allocation2 [shape = 'bf16[16,256]{1,0:T(8,128)(2,1)}', space=vmem, size = 0x2000, scoped, tag = 'scratch operand']
  #allocation3 [shape = 'bf16[16,256]{1,0:T(8,128)(2,1)}', space=vmem, size = 0x2000, scoped, tag = 'scratch operand']
  #allocation4 [shape = 'bf16[16,256]{1,0:T(8,128)(2,1)}', space=vmem, size = 0x2000, scoped, tag = 'scratch operand']
  %s0 = inlined_call_operand.vmem [shape: f32[2,8,256], index: 0, kind: input, shape index: {}]
  %s1 = inlined_call_operand.vmem [shape: f32[48,8], index: 1, kind: input, shape index: {}]
  %s2 = inlined_call_operand.vmem [shape: f32[48,1], index: 2, kind: input, shape index: {}]
  %s3 = inlined_call_operand.hbm [shape: f32[2,8,256], index: 3, kind: output, shape index: {}]
  %s4 = sld [smem:[#allocation0]]
  $region49: #{tpu_custom_call.1} parent=0
    _
  %s6 = ssub.s32 1, %s4
  %s7 = scalar_select 0, %s6, %s4
  $region1: #{tpu_custom_call.1} parent=0
    #allocation5 [shape = 'u8[16384]{0}', space=vmem, size = 0x4000, scoped, tag = 'output window, operand 0']
    #allocation6 [shape = 's32[2]{0}', space=sflag, size = 0x8, scoped, tag = 'scoped memory for tpu_custom_call.1']
    %8 = vsyncpa [#allocation6], 0
    %s9 = scalar_lea.sflag [#allocation6], 1
    %10 = vsyncpa %s9, 0
    loop: start=0, step=1, limit=4
    $region2: #{tpu_custom_call.1} parent=1 // loop_pre_header
      _
    $region3: #{tpu_custom_call.1} parent=1 // loop_header
      %s12 = sphi 0, %s16
      %p13 = scmp.ge.s32.totalorder %s12, 4
      %s19 = sphi 0, %s31
      %s20 = sphi 0, %s27
      %s21 = sphi 0, %s19
      %s22 = sphi 0, %s20
      %s23 = sphi 0, %s21
      %s24 = sphi 0, %s22
      %s34 = sphi 0, %s36
      %s37 = sphi 0, %s34
      %s38 = sphi 0, %s37
      %s54 = sphi 0, %s38
      %s58 = sphi 0, %s58
      %s60 = sphi 0, %s58
      %s61 = sphi 0, %s60
      %s75 = sphi 0, %s61
      %s79 = sphi 0, %s79
      %s81 = sphi 0, %s79
      %s82 = sphi 0, %s81
      %s96 = sphi 0, %s82
      %s104 = sphi 0, %s106
      %s107 = sphi 0, %s104
      %s108 = sphi 0, %s107
      %s124 = sphi 0, %s108
    $region4: #{tpu_custom_call.1} parent=1 // loop_header_branch
      %15 = sbr.rel (%p13) target = $region8
    $region5: #{tpu_custom_call.1} parent=1 // loop_body
      %s17 = ssub.s32 %s12, 1
      %s18 = ssub.s32 %s12, 2
      %s25 = sadd.s32 1, %s20
      %p26 = scmp.ge.s32.totalorder %s25, 1
      %s27 = scalar_select %p26, 0, %s25
      %s28 = sadd.s32 1, %s19
      %s29 = scalar_select %p26, %s28, %s19
      %p30 = scmp.ge.s32.totalorder %s29, 2
      %s31 = scalar_select %p30, 0, %s29
      %s32 = ssub.s32 %s19, %s31
      %p33 = scmp.eq.s32.totalorder %s32, 0
      %s35 = sadd.s32 %s34, 1
      %s36 = scalar_select %p33, %s34, %s35
      %p39 = pneg %p33
      %p40 = scmp.eq.s32.totalorder %s12, 1
      %p41 = por %p39, %p40
      %p42 = scmp.ne.s32.totalorder %s34, %s37
      %p43 = scmp.eq.s32.totalorder %s12, 0
      %p44 = por %p42, %p43
      %p45 = scmp.ne.s32.totalorder %s34, %s37
      %p46 = scmp.eq.s32.totalorder %s17, 1
      %p47 = por %p45, %p46
      %p48 = scmp.ne.s32.totalorder %s37, %s38
      %p49 = scmp.eq.s32.totalorder %s17, 0
      %p50 = por %p48, %p49
      %p51 = scmp.ne.s32.totalorder %s37, %s38
      %p52 = scmp.eq.s32.totalorder %s18, 1
      %p53 = por %p51, %p52
      %p55 = scmp.ne.s32.totalorder %s38, %s54
      %p56 = scmp.eq.s32.totalorder %s18, 0
      %p57 = por %p55, %p56
      %s59 = sadd.s32 %s58, 1
      %p62 = scmp.eq.s32.totalorder %s12, 1
      %p63 = scmp.ne.s32.totalorder %s58, %s60
      %p64 = scmp.eq.s32.totalorder %s12, 0
      %p65 = por %p63, %p64
      %p66 = scmp.ne.s32.totalorder %s58, %s60
      %p67 = scmp.eq.s32.totalorder %s17, 1
      %p68 = por %p66, %p67
      %p69 = scmp.ne.s32.totalorder %s60, %s61
      %p70 = scmp.eq.s32.totalorder %s17, 0
      %p71 = por %p69, %p70
      %p72 = scmp.ne.s32.totalorder %s60, %s61
      %p73 = scmp.eq.s32.totalorder %s18, 1
      %p74 = por %p72, %p73
      %p76 = scmp.ne.s32.totalorder %s61, %s75
      %p77 = scmp.eq.s32.totalorder %s18, 0
      %p78 = por %p76, %p77
      %s80 = sadd.s32 %s79, 1
      %p83 = scmp.eq.s32.totalorder %s12, 1
      %p84 = scmp.ne.s32.totalorder %s79, %s81
      %p85 = scmp.eq.s32.totalorder %s12, 0
      %p86 = por %p84, %p85
      %p87 = scmp.ne.s32.totalorder %s79, %s81
      %p88 = scmp.eq.s32.totalorder %s17, 1
      %p89 = por %p87, %p88
      %p90 = scmp.ne.s32.totalorder %s81, %s82
      %p91 = scmp.eq.s32.totalorder %s17, 0
      %p92 = por %p90, %p91
      %p93 = scmp.ne.s32.totalorder %s81, %s82
      %p94 = scmp.eq.s32.totalorder %s18, 1
      %p95 = por %p93, %p94
      %p97 = scmp.ne.s32.totalorder %s82, %s96
      %p98 = scmp.eq.s32.totalorder %s18, 0
      %p99 = por %p97, %p98
      %s100 = ssub.s32 %s19, %s31
      %s101 = ssub.s32 %s20, %s27
      %s102 = sor.u32 %s100, %s101
      %p103 = scmp.eq.s32.totalorder %s102, 0
      %s105 = sadd.s32 %s104, 1
      %s106 = scalar_select %p103, %s104, %s105
      %p109 = pneg %p103
      %p110 = scmp.eq.s32.totalorder %s12, 1
      %p111 = por %p109, %p110
      %p112 = scmp.ne.s32.totalorder %s104, %s107
      %p113 = scmp.eq.s32.totalorder %s12, 0
      %p114 = por %p112, %p113
      %p115 = scmp.ne.s32.totalorder %s104, %s107
      %p116 = scmp.eq.s32.totalorder %s17, 1
      %p117 = por %p115, %p116
      %p118 = scmp.ne.s32.totalorder %s107, %s108
      %p119 = scmp.eq.s32.totalorder %s17, 0
      %p120 = por %p118, %p119
      %p121 = scmp.ne.s32.totalorder %s107, %s108
      %p122 = scmp.eq.s32.totalorder %s18, 1
      %p123 = por %p121, %p122
      %p125 = scmp.ne.s32.totalorder %s108, %s124
      %p126 = scmp.eq.s32.totalorder %s18, 0
      %p127 = por %p125, %p126
      %p128 = scmp.le.s32.totalorder 1, %s12
      %p129 = scmp.lt.s32.totalorder %s12, 3
      %p130 = pnand %p128, %p129
      %p131 = pneg %p130
      // Predicated region
      $region9: #{tpu_custom_call.1} parent=5 // pred_check
        _
      $region10: #{tpu_custom_call.1} parent=5 // pred_check_branch
        %133 = sbr.rel (%p130) target = $region12
      $region11: #{tpu_custom_call.1} parent=5 // pred_region
        %s134 = ssub.s32 %s12, 1
        // Predicated region
        $region13: #{tpu_custom_call.1} parent=11 // pred_check
          %p135 = pneg %p71
        $region14: #{tpu_custom_call.1} parent=11 // pred_check_branch
          %137 = sbr.rel (%p135) target = $region16
        $region15: #{tpu_custom_call.1} parent=11 // pred_region
          _
        $region16: #{tpu_custom_call.1} parent=11 // pred_fallthru
          _
        // Predicated region
        $region17: #{tpu_custom_call.1} parent=11 // pred_check
          %p138 = pneg %p92
        $region18: #{tpu_custom_call.1} parent=11 // pred_check_branch
          %140 = sbr.rel (%p138) target = $region20
        $region19: #{tpu_custom_call.1} parent=11 // pred_region
          _
        $region20: #{tpu_custom_call.1} parent=11 // pred_fallthru
          _
      $region12: #{tpu_custom_call.1} parent=5 // pred_fallthru
        _
      %p141 = scmp.lt.s32.totalorder %s12, 2
      // Predicated region
      $region21: #{tpu_custom_call.1} parent=5 // pred_check
        %p142 = pneg %p141
      $region22: #{tpu_custom_call.1} parent=5 // pred_check_branch
        %144 = sbr.rel (%p142) target = $region24
      $region23: #{tpu_custom_call.1} parent=5 // pred_region
        // Predicated region
        $region25: #{tpu_custom_call.1} parent=23 // pred_check
          %p145 = pneg %p44
        $region26: #{tpu_custom_call.1} parent=23 // pred_check_branch
          %147 = sbr.rel (%p145) target = $region28
        $region27: #{tpu_custom_call.1} parent=23 // pred_region
          %p148 = scmp.lt.s32.totalorder %s19, 1
          %s149 = scalar_select %p148, %s19, 1
          %s150 = smul.addr %s149, 2
          %s151 = smul.addr %s150, 8
          %s152 = scalar_lea.vmem %s0, %s151
        $region28: #{tpu_custom_call.1} parent=23 // pred_fallthru
          _
      $region24: #{tpu_custom_call.1} parent=5 // pred_fallthru
        _
      %p153 = scmp.le.s32.totalorder 1, %s12
      %p154 = scmp.lt.s32.totalorder %s12, 3
      %p155 = pnand %p153, %p154
      %p156 = pneg %p155
      // Predicated region
      $region29: #{tpu_custom_call.1} parent=5 // pred_check
        _
      $region30: #{tpu_custom_call.1} parent=5 // pred_check_branch
        %158 = sbr.rel (%p155) target = $region32
      $region31: #{tpu_custom_call.1} parent=5 // pred_region
        %s159 = ssub.s32 %s12, 1
        %p160 = scmp.lt.s32.totalorder %s21, 1
        %s161 = scalar_select %p160, %s21, 1
        %s162 = smul.addr %s161, 2
        %s163 = smul.addr %s162, 8
        %s164 = scalar_lea.vmem %s0, %s163
        %p165 = pneg %p50
        %p166 = pneg %p47
        %p167 = pneg %p71
        %p168 = pneg %p68
        %p169 = pneg %p92
        %p170 = pneg %p89
        %p171 = pneg %p120
        %p172 = pneg %p117
        %s173 = sand.u32 %s107, 1
        %s174 = scalar_lea.sflag [#allocation6], %s173
        %s175 = sand.u32 %s107, 1
        %s176 = smul.addr %s175, 16
        %s177 = scalar_lea.vmem [#allocation5], %s176
        %p178 = scmp.lt.s32.totalorder %s21, 1
        %s179 = scalar_select %p178, %s21, 1
        %s180 = smul.addr %s179, 2
        %s181 = smul.addr %s180, 8
        %s182 = scalar_lea.vmem %s0, %s181
        %s183 = smul.u32 2, %s22
        %p185 = scmp.eq.s32.totalorder %s22, 0
        // Predicated region
        $region33: #{tpu_custom_call.1} parent=31 // pred_check
          %p186 = pneg %p185
        $region34: #{tpu_custom_call.1} parent=31 // pred_check_branch
          %188 = sbr.rel (%p186) target = $region36
        $region35: #{tpu_custom_call.1} parent=31 // pred_region
          %v189 = vld [vmem:[%s182] sm:$0xff]
          %v190 = vld [vmem:[%s182 + $0x8] sm:$0xff]
          %v191 = vld [vmem:[%s1] sm:$0xff]
          %v192 = vld [vmem:[%s1 + $0x8] sm:$0xff]
          %v193 = vld [vmem:[%s1 + $0x10] sm:$0xff]
          %v194 = vld [vmem:[%s1 + $0x18] sm:$0xff]
          %v195 = vld [vmem:[%s1 + $0x20] sm:$0xff]
          %v196 = vld [vmem:[%s1 + $0x28] sm:$0xff]
          %v197 = vld [vmem:[%s2] sm:$0xff]
          %v198 = vld [vmem:[%s2 + $0x8] sm:$0xff]
          %v199 = vld [vmem:[%s2 + $0x10] sm:$0xff]
          %v200 = vld [vmem:[%s2 + $0x18] sm:$0xff]
          %v201 = vld [vmem:[%s2 + $0x20] sm:$0xff]
          %v202 = vld [vmem:[%s2 + $0x28] sm:$0xff]
          %204 = vset.pattern.permute.xlu0 0
          %205 = vperm.xlu0 %204, %v197
          %v206 = vpop.permute.xlu0 %205
          %209 = vset.pattern.permute.xlu0 0
          %210 = vperm.xlu0 %209, %v198
          %v211 = vpop.permute.xlu0 %210
          %214 = vset.pattern.permute.xlu0 0
          %215 = vperm.xlu0 %214, %v199
          %v216 = vpop.permute.xlu0 %215
          %219 = vset.pattern.permute.xlu0 0
          %220 = vperm.xlu0 %219, %v200
          %v221 = vpop.permute.xlu0 %220
          %224 = vset.pattern.permute.xlu0 0
          %225 = vperm.xlu0 %224, %v201
          %v226 = vpop.permute.xlu0 %225
          %229 = vset.pattern.permute.xlu0 0
          %230 = vperm.xlu0 %229, %v202
          %v231 = vpop.permute.xlu0 %230
          %vm233 = vcmask 64512
          %v235 = vsel %vm233, %v191, 0
          %v238 = vsel %vm233, %v192, 0
          %v241 = vsel %vm233, %v193, 0
          %v244 = vsel %vm233, %v194, 0
          %v247 = vsel %vm233, %v195, 0
          %v250 = vsel %vm233, %v196, 0
          %252 = vmatprep.subr.mxu0 0.0
          %253 = vmatpush1.msra.mxu0 0.0
          %254 = vmatprep.subr.mxu0 0.0
          %255 = vmatpush1.msra.mxu0 0.0
          %256 = vmatprep.subr.mxu0 0.0
          %257 = vmatpush1.msra.mxu0 0.0
          %258 = vmatprep.subr.mxu0 0.0
          %259 = vmatpush1.msra.mxu0 0.0
          %260 = vmatprep.subr.mxu0 0.0
          %261 = vmatpush1.msra.mxu0 0.0
          %262 = vmatprep.subr.mxu0 0.0
          %263 = vmatpush1.msra.mxu0 0.0
          %264 = vmatprep.subr.mxu0 0.0
          %265 = vmatpush1.msra.mxu0 0.0
          %266 = vmatprep.subr.mxu0 0.0
          %267 = vmatpush1.msra.mxu0 0.0
          %268 = vmatprep.subr.mxu0 0.0
          %269 = vmatpush1.msra.mxu0 0.0
          %270 = vmatprep.subr.mxu0 0.0
          %271 = vmatpush1.msra.mxu0 0.0
          %272 = vmatprep.subr.mxu0 0.0
          %273 = vmatpush1.msra.mxu0 0.0
          %274 = vmatprep.subr.mxu0 0.0
          %275 = vmatpush1.msra.mxu0 0.0
          %276 = vmatprep.subr.mxu0 0.0
          %277 = vmatpush1.msra.mxu0 0.0
          %278 = vmatprep.subr.mxu0 0.0
          %279 = vmatpush1.msra.mxu0 0.0
          %280 = vmatprep.subr.mxu0 0.0
          %281 = vmatpush1.msra.mxu0 0.0
          %282 = vmatprep.subr.mxu0 %v190
          %283 = vmatpush1.msra.mxu0 %v189
          %284 = vmatprep.subr.mxu0 0.0
          %285 = vmatpush2.msra.mxu0 0.0
          %286 = vmatprep.subr.mxu0 0.0
          %287 = vmatpush2.msra.mxu0 0.0
          %288 = vmatprep.subr.mxu0 0.0
          %289 = vmatpush2.msra.mxu0 0.0
          %290 = vmatprep.subr.mxu0 0.0
          %291 = vmatpush2.msra.mxu0 0.0
          %292 = vmatprep.subr.mxu0 0.0
          %293 = vmatpush2.msra.mxu0 0.0
          %294 = vmatprep.subr.mxu0 0.0
          %295 = vmatpush2.msra.mxu0 0.0
          %296 = vmatprep.subr.mxu0 0.0
          %297 = vmatpush2.msra.mxu0 0.0
          %298 = vmatprep.subr.mxu0 0.0
          %299 = vmatpush2.msra.mxu0 0.0
          %300 = vmatprep.subr.mxu0 0.0
          %301 = vmatpush2.msra.mxu0 0.0
          %302 = vmatprep.subr.mxu0 0.0
          %303 = vmatpush2.msra.mxu0 0.0
          %304 = vmatprep.subr.mxu0 0.0
          %305 = vmatpush2.msra.mxu0 0.0
          %306 = vmatprep.subr.mxu0 0.0
          %307 = vmatpush2.msra.mxu0 0.0
          %308 = vmatprep.subr.mxu0 0.0
          %309 = vmatpush2.msra.mxu0 0.0
          %310 = vmatprep.subr.mxu0 0.0
          %311 = vmatpush2.msra.mxu0 0.0
          %312 = vmatprep.subr.mxu0 0.0
          %313 = vmatpush2.msra.mxu0 0.0
          %314 = vmatprep.subr.mxu0 0.0
          %315 = vmatpush2.msra.mxu0 0.0
          %316 = vmatprep.mubr.f32.mxu0 0.0
          %317 = vmatmul.mubr.f32.gmra.mxu0 %v235
          %v318 = vpop.f32.mrf.mxu0
          %v319 = vadd.f32 %v206, %v318
          %v320 = vpop.f32.mrf.mxu0
          %v321 = vadd.f32 %v206, %v320
          %322 = vmatprep.mubr.f32.mxu0 0.0
          %323 = vmatmul.mubr.f32.gmra.mxu0 %v238
          %v324 = vpop.f32.mrf.mxu0
          %v325 = vadd.f32 %v211, %v324
          %v326 = vpop.f32.mrf.mxu0
          %v327 = vadd.f32 %v211, %v326
          %328 = vmatprep.mubr.f32.mxu0 0.0
          %329 = vmatmul.mubr.f32.gmra.mxu0 %v241
          %v330 = vpop.f32.mrf.mxu0
          %v331 = vadd.f32 %v216, %v330
          %v332 = vpop.f32.mrf.mxu0
          %v333 = vadd.f32 %v216, %v332
          %334 = vmatprep.mubr.f32.mxu0 0.0
          %335 = vmatmul.mubr.f32.gmra.mxu0 %v244
          %v336 = vpop.f32.mrf.mxu0
          %v337 = vadd.f32 %v221, %v336
          %v338 = vpop.f32.mrf.mxu0
          %v339 = vadd.f32 %v221, %v338
          %340 = vmatprep.mubr.f32.mxu0 0.0
          %341 = vmatmul.mubr.f32.gmra.mxu0 %v247
          %v342 = vpop.f32.mrf.mxu0
          %v343 = vadd.f32 %v226, %v342
          %v344 = vpop.f32.mrf.mxu0
          %v345 = vadd.f32 %v226, %v344
          %346 = vmatprep.mubr.f32.mxu0 0.0
          %347 = vmatmul.mubr.f32.gmra.mxu0 %v250
          %v348 = vpop.f32.mrf.mxu0
          %v349 = vadd.f32 %v231, %v348
          %v350 = vpop.f32.mrf.mxu0
          %v351 = vadd.f32 %v231, %v350
          %352 = vdwg.mxu0
          %v353 = vpack.c.bf16 %v325, %v319
          %v354 = vpack.c.bf16 %v327, %v321
          %v357 = vunpack.c.l.b16 %v353
          %v358 = vunpack.c.l.b16 %v354
          %v359 = vunpack.c.h.b16 %v353
          %v360 = vunpack.c.h.b16 %v354
          %v361 = vpack.c.b16 %v358, %v357
          %v362 = vpack.c.b16 %v360, %v359
          %365 = vst [vmem:[#allocation2] sm:$0xff] %v361
          %366 = vst [vmem:[#allocation2 + $0x8] sm:$0xff] %v362
          %v367 = vpack.c.bf16 %v337, %v331
          %v368 = vpack.c.bf16 %v339, %v333
          %v371 = vunpack.c.l.b16 %v367
          %v372 = vunpack.c.l.b16 %v368
          %v373 = vunpack.c.h.b16 %v367
          %v374 = vunpack.c.h.b16 %v368
          %v375 = vpack.c.b16 %v372, %v371
          %v376 = vpack.c.b16 %v374, %v373
          %379 = vst [vmem:[#allocation3] sm:$0xff] %v375
          %380 = vst [vmem:[#allocation3 + $0x8] sm:$0xff] %v376
          %v381 = vpack.c.bf16 %v349, %v343
          %v382 = vpack.c.bf16 %v351, %v345
          %v385 = vunpack.c.l.b16 %v381
          %v386 = vunpack.c.l.b16 %v382
          %v387 = vunpack.c.h.b16 %v381
          %v388 = vunpack.c.h.b16 %v382
          %v389 = vpack.c.b16 %v386, %v385
          %v390 = vpack.c.b16 %v388, %v387
          %393 = vst [vmem:[#allocation4] sm:$0xff] %v389
          %394 = vst [vmem:[#allocation4 + $0x8] sm:$0xff] %v390
        $region36: #{tpu_custom_call.1} parent=31 // pred_fallthru
          _
        %s395 = smul.u32 %s22, 256
        %s396 = sshra.s32 %s395, 7
        %s397 = sand.u32 %s395, 127
        %s398 = smul.addr %s396, 8
        %s399 = scalar_lea.vmem %s182, %s398
        %v400 = vld [vmem:[%s399] sm:$0xff]
        %v401 = vld [vmem:[%s399 + $0x8] sm:$0xff]
        %s402 = smul.addr %s396, 4
        %s403 = scalar_lea.vmem [#allocation3], %s402
        %v404 = vld [vmem:[%s403] sm:$0xff]
        %v405 = vld [vmem:[%s403 + $0x8] sm:$0xff]
        %v406 = vld [vmem:[#allocation2] sm:$0xff]
        %v407 = vld [vmem:[#allocation2 + $0x8] sm:$0xff]
        %v410 = vunpack.c.l.b16 %v406
        %v411 = vunpack.c.h.b16 %v406
        %v412 = vunpack.c.l.b16 %v407
        %v413 = vunpack.c.h.b16 %v407
        %v414 = vpack.c.b16 %v412, %v410
        %v415 = vpack.c.b16 %v413, %v411
        %418 = vxpose.xlu0.c.b16.start [1/8] %v414, 128
        %419 = vxpose.xlu0.c.b16.cont [2/8] 0, 128
        %420 = vxpose.xlu0.c.b16.cont [3/8] 0, 128
        %421 = vxpose.xlu0.c.b16.cont [4/8] 0, 128
        %422 = vxpose.xlu0.c.b16.cont [5/8] 0, 128
        %423 = vxpose.xlu0.c.b16.cont [6/8] 0, 128
        %424 = vxpose.xlu0.c.b16.cont [7/8] 0, 128
        %425 = vxpose.xlu0.c.b16.end [8/8] 0, 128
        %v426 = vpop.trf.xlu0
        %v427 = vpop.trf.xlu0
        %v428 = vpop.trf.xlu0
        %v429 = vpop.trf.xlu0
        %v430 = vpop.trf.xlu0
        %v431 = vpop.trf.xlu0
        %v432 = vpop.trf.xlu0
        %v433 = vpop.trf.xlu0
        %434 = vxpose.xlu0.c.b16.start [1/8] %v415, 128
        %435 = vxpose.xlu0.c.b16.cont [2/8] 0, 128
        %436 = vxpose.xlu0.c.b16.cont [3/8] 0, 128
        %437 = vxpose.xlu0.c.b16.cont [4/8] 0, 128
        %438 = vxpose.xlu0.c.b16.cont [5/8] 0, 128
        %439 = vxpose.xlu0.c.b16.cont [6/8] 0, 128
        %440 = vxpose.xlu0.c.b16.cont [7/8] 0, 128
        %441 = vxpose.xlu0.c.b16.end [8/8] 0, 128
        %v442 = vpop.trf.xlu0
        %v443 = vpop.trf.xlu0
        %v444 = vpop.trf.xlu0
        %v445 = vpop.trf.xlu0
        %v446 = vpop.trf.xlu0
        %v447 = vpop.trf.xlu0
        %v448 = vpop.trf.xlu0
        %v449 = vpop.trf.xlu0
        %v452 = vunpack.c.l.b16 %v404
        %v453 = vunpack.c.h.b16 %v404
        %v454 = vunpack.c.l.b16 %v405
        %v455 = vunpack.c.h.b16 %v405
        %v456 = vpack.c.b16 %v454, %v452
        %v457 = vpack.c.b16 %v455, %v453
        %vm460 = vcmask 130048
        %v462 = vsel %vm460, %v426, 0
        %v465 = vsel %vm460, %v427, 0
        %v468 = vsel %vm460, %v428, 0
        %v471 = vsel %vm460, %v429, 0
        %v474 = vsel %vm460, %v430, 0
        %v477 = vsel %vm460, %v431, 0
        %v480 = vsel %vm460, %v432, 0
        %v483 = vsel %vm460, %v433, 0
        %v486 = vsel %vm460, %v442, 0
        %v489 = vsel %vm460, %v443, 0
        %v492 = vsel %vm460, %v444, 0
        %v495 = vsel %vm460, %v445, 0
        %v498 = vsel %vm460, %v446, 0
        %v501 = vsel %vm460, %v447, 0
        %v504 = vsel %vm460, %v448, 0
        %v507 = vsel %vm460, %v449, 0
        %509 = vmatprep.subr.bf16.mxu0 0
        %510 = vmatpush1.bf16.msra.mxu0 0
        %511 = vmatprep.subr.bf16.mxu0 0
        %512 = vmatpush1.bf16.msra.mxu0 0
        %513 = vmatprep.subr.bf16.mxu0 0
        %514 = vmatpush1.bf16.msra.mxu0 0
        %515 = vmatprep.subr.bf16.mxu0 0
        %516 = vmatpush1.bf16.msra.mxu0 0
        %517 = vmatprep.subr.bf16.mxu0 0
        %518 = vmatpush1.bf16.msra.mxu0 0
        %519 = vmatprep.subr.bf16.mxu0 0
        %520 = vmatpush1.bf16.msra.mxu0 0
        %521 = vmatprep.subr.bf16.mxu0 0
        %522 = vmatpush1.bf16.msra.mxu0 0
        %523 = vmatprep.subr.bf16.mxu0 %v457
        %524 = vmatpush1.bf16.msra.mxu0 %v456
        %525 = vmatprep.subr.bf16.mxu0 0
        %526 = vmatpush2.bf16.msra.mxu0 0
        %527 = vmatprep.subr.bf16.mxu0 0
        %528 = vmatpush2.bf16.msra.mxu0 0
        %529 = vmatprep.subr.bf16.mxu0 0
        %530 = vmatpush2.bf16.msra.mxu0 0
        %531 = vmatprep.subr.bf16.mxu0 0
        %532 = vmatpush2.bf16.msra.mxu0 0
        %533 = vmatprep.subr.bf16.mxu0 0
        %534 = vmatpush2.bf16.msra.mxu0 0
        %535 = vmatprep.subr.bf16.mxu0 0
        %536 = vmatpush2.bf16.msra.mxu0 0
        %537 = vmatprep.subr.bf16.mxu0 0
        %538 = vmatpush2.bf16.msra.mxu0 0
        %539 = vmatprep.subr.bf16.mxu0 0
        %540 = vmatpush2.bf16.msra.mxu0 0
        %541 = vmatprep.mubr.bf16.mxu0 0
        %542 = vmatmul.mubr.bf16.gmra.mxu0 %v462
        %v543 = vpop.f32.mrf.mxu0
        %v544 = vadd.f32 0.0, %v543
        %v545 = vpop.f32.mrf.mxu0
        %v546 = vadd.f32 0.0, %v545
        %v547 = vpop.f32.mrf.mxu0
        %v548 = vadd.f32 0.0, %v547
        %v549 = vpop.f32.mrf.mxu0
        %v550 = vadd.f32 0.0, %v549
        %551 = vmatprep.mubr.bf16.mxu0 0
        %552 = vmatmul.mubr.bf16.gmra.mxu0 %v465
        %v553 = vpop.f32.mrf.mxu0
        %v554 = vadd.f32 0.0, %v553
        %v555 = vpop.f32.mrf.mxu0
        %v556 = vadd.f32 0.0, %v555
        %v557 = vpop.f32.mrf.mxu0
        %v558 = vadd.f32 0.0, %v557
        %v559 = vpop.f32.mrf.mxu0
        %v560 = vadd.f32 0.0, %v559
        %561 = vmatprep.mubr.bf16.mxu0 0
        %562 = vmatmul.mubr.bf16.gmra.mxu0 %v468
        %v563 = vpop.f32.mrf.mxu0
        %v564 = vadd.f32 0.0, %v563
        %v565 = vpop.f32.mrf.mxu0
        %v566 = vadd.f32 0.0, %v565
        %v567 = vpop.f32.mrf.mxu0
        %v568 = vadd.f32 0.0, %v567
        %v569 = vpop.f32.mrf.mxu0
        %v570 = vadd.f32 0.0, %v569
        %571 = vmatprep.mubr.bf16.mxu0 0
        %572 = vmatmul.mubr.bf16.gmra.mxu0 %v471
        %v573 = vpop.f32.mrf.mxu0
        %v574 = vadd.f32 0.0, %v573
        %v575 = vpop.f32.mrf.mxu0
        %v576 = vadd.f32 0.0, %v575
        %v577 = vpop.f32.mrf.mxu0
        %v578 = vadd.f32 0.0, %v577
        %v579 = vpop.f32.mrf.mxu0
        %v580 = vadd.f32 0.0, %v579
        %581 = vmatprep.mubr.bf16.mxu0 0
        %582 = vmatmul.mubr.bf16.gmra.mxu0 %v474
        %v583 = vpop.f32.mrf.mxu0
        %v584 = vadd.f32 0.0, %v583
        %v585 = vpop.f32.mrf.mxu0
        %v586 = vadd.f32 0.0, %v585
        %v587 = vpop.f32.mrf.mxu0
        %v588 = vadd.f32 0.0, %v587
        %v589 = vpop.f32.mrf.mxu0
        %v590 = vadd.f32 0.0, %v589
        %591 = vmatprep.mubr.bf16.mxu0 0
        %592 = vmatmul.mubr.bf16.gmra.mxu0 %v477
        %v593 = vpop.f32.mrf.mxu0
        %v594 = vadd.f32 0.0, %v593
        %v595 = vpop.f32.mrf.mxu0
        %v596 = vadd.f32 0.0, %v595
        %v597 = vpop.f32.mrf.mxu0
        %v598 = vadd.f32 0.0, %v597
        %v599 = vpop.f32.mrf.mxu0
        %v600 = vadd.f32 0.0, %v599
        %601 = vmatprep.mubr.bf16.mxu0 0
        %602 = vmatmul.mubr.bf16.gmra.mxu0 %v480
        %v603 = vpop.f32.mrf.mxu0
        %v604 = vadd.f32 0.0, %v603
        %v605 = vpop.f32.mrf.mxu0
        %v606 = vadd.f32 0.0, %v605
        %v607 = vpop.f32.mrf.mxu0
        %v608 = vadd.f32 0.0, %v607
        %v609 = vpop.f32.mrf.mxu0
        %v610 = vadd.f32 0.0, %v609
        %611 = vmatprep.mubr.bf16.mxu0 0
        %612 = vmatmul.mubr.bf16.gmra.mxu0 %v483
        %v613 = vpop.f32.mrf.mxu0
        %v614 = vadd.f32 0.0, %v613
        %v615 = vpop.f32.mrf.mxu0
        %v616 = vadd.f32 0.0, %v615
        %v617 = vpop.f32.mrf.mxu0
        %v618 = vadd.f32 0.0, %v617
        %v619 = vpop.f32.mrf.mxu0
        %v620 = vadd.f32 0.0, %v619
        %621 = vmatprep.mubr.bf16.mxu0 0
        %622 = vmatmul.mubr.bf16.gmra.mxu0 %v486
        %v623 = vpop.f32.mrf.mxu0
        %v624 = vadd.f32 0.0, %v623
        %v625 = vpop.f32.mrf.mxu0
        %v626 = vadd.f32 0.0, %v625
        %v627 = vpop.f32.mrf.mxu0
        %v628 = vadd.f32 0.0, %v627
        %v629 = vpop.f32.mrf.mxu0
        %v630 = vadd.f32 0.0, %v629
        %631 = vmatprep.mubr.bf16.mxu0 0
        %632 = vmatmul.mubr.bf16.gmra.mxu0 %v489
        %v633 = vpop.f32.mrf.mxu0
        %v634 = vadd.f32 0.0, %v633
        %v635 = vpop.f32.mrf.mxu0
        %v636 = vadd.f32 0.0, %v635
        %v637 = vpop.f32.mrf.mxu0
        %v638 = vadd.f32 0.0, %v637
        %v639 = vpop.f32.mrf.mxu0
        %v640 = vadd.f32 0.0, %v639
        %641 = vmatprep.mubr.bf16.mxu0 0
        %642 = vmatmul.mubr.bf16.gmra.mxu0 %v492
        %v643 = vpop.f32.mrf.mxu0
        %v644 = vadd.f32 0.0, %v643
        %v645 = vpop.f32.mrf.mxu0
        %v646 = vadd.f32 0.0, %v645
        %v647 = vpop.f32.mrf.mxu0
        %v648 = vadd.f32 0.0, %v647
        %v649 = vpop.f32.mrf.mxu0
        %v650 = vadd.f32 0.0, %v649
        %651 = vmatprep.mubr.bf16.mxu0 0
        %652 = vmatmul.mubr.bf16.gmra.mxu0 %v495
        %v653 = vpop.f32.mrf.mxu0
        %v654 = vadd.f32 0.0, %v653
        %v655 = vpop.f32.mrf.mxu0
        %v656 = vadd.f32 0.0, %v655
        %v657 = vpop.f32.mrf.mxu0
        %v658 = vadd.f32 0.0, %v657
        %v659 = vpop.f32.mrf.mxu0
        %v660 = vadd.f32 0.0, %v659
        %661 = vmatprep.mubr.bf16.mxu0 0
        %662 = vmatmul.mubr.bf16.gmra.mxu0 %v498
        %v663 = vpop.f32.mrf.mxu0
        %v664 = vadd.f32 0.0, %v663
        %v665 = vpop.f32.mrf.mxu0
        %v666 = vadd.f32 0.0, %v665
        %v667 = vpop.f32.mrf.mxu0
        %v668 = vadd.f32 0.0, %v667
        %v669 = vpop.f32.mrf.mxu0
        %v670 = vadd.f32 0.0, %v669
        %671 = vmatprep.mubr.bf16.mxu0 0
        %672 = vmatmul.mubr.bf16.gmra.mxu0 %v501
        %v673 = vpop.f32.mrf.mxu0
        %v674 = vadd.f32 0.0, %v673
        %v675 = vpop.f32.mrf.mxu0
        %v676 = vadd.f32 0.0, %v675
        %v677 = vpop.f32.mrf.mxu0
        %v678 = vadd.f32 0.0, %v677
        %v679 = vpop.f32.mrf.mxu0
        %v680 = vadd.f32 0.0, %v679
        %681 = vmatprep.mubr.bf16.mxu0 0
        %682 = vmatmul.mubr.bf16.gmra.mxu0 %v504
        %v683 = vpop.f32.mrf.mxu0
        %v684 = vadd.f32 0.0, %v683
        %v685 = vpop.f32.mrf.mxu0
        %v686 = vadd.f32 0.0, %v685
        %v687 = vpop.f32.mrf.mxu0
        %v688 = vadd.f32 0.0, %v687
        %v689 = vpop.f32.mrf.mxu0
        %v690 = vadd.f32 0.0, %v689
        %691 = vmatprep.mubr.bf16.mxu0 0
        %692 = vmatmul.mubr.bf16.gmra.mxu0 %v507
        %v693 = vpop.f32.mrf.mxu0
        %v694 = vadd.f32 0.0, %v693
        %v695 = vpop.f32.mrf.mxu0
        %v696 = vadd.f32 0.0, %v695
        %v697 = vpop.f32.mrf.mxu0
        %v698 = vadd.f32 0.0, %v697
        %v699 = vpop.f32.mrf.mxu0
        %v700 = vadd.f32 0.0, %v699
        %701 = vdwg.mxu0
        %v702 = vmax.f32 %v544, %v554
        %v703 = vmax.f32 %v548, %v558
        %v704 = vmax.f32 %v702, %v564
        %v705 = vmax.f32 %v703, %v568
        %v706 = vmax.f32 %v704, %v574
        %v707 = vmax.f32 %v705, %v578
        %v708 = vmax.f32 %v706, %v584
        %v709 = vmax.f32 %v707, %v588
        %v710 = vmax.f32 %v708, %v594
        %v711 = vmax.f32 %v709, %v598
        %v712 = vmax.f32 %v710, %v604
        %v713 = vmax.f32 %v711, %v608
        %v714 = vmax.f32 %v712, %v614
        %v715 = vmax.f32 %v713, %v618
        %v716 = vmax.f32 %v714, %v624
        %v717 = vmax.f32 %v715, %v628
        %v718 = vmax.f32 %v716, %v634
        %v719 = vmax.f32 %v717, %v638
        %v720 = vmax.f32 %v718, %v644
        %v721 = vmax.f32 %v719, %v648
        %v722 = vmax.f32 %v720, %v654
        %v723 = vmax.f32 %v721, %v658
        %v724 = vmax.f32 %v722, %v664
        %v725 = vmax.f32 %v723, %v668
        %v726 = vmax.f32 %v724, %v674
        %v727 = vmax.f32 %v725, %v678
        %v728 = vmax.f32 %v726, %v684
        %v729 = vmax.f32 %v727, %v688
        %v730 = vmax.f32 %v728, %v694
        %v731 = vmax.f32 %v729, %v698
        %v732 = vmax.f32 %v730, %v731
        %v733 = vrot.slane %v732, 4
        %v734 = vmax.f32 %v732, %v733
        %v735 = vrot.slane %v734, 2
        %v736 = vmax.f32 %v734, %v735
        %v737 = vrot.slane %v736, 1
        %v738 = vmax.f32 %v736, %v737
        %v739 = vmax.f32 %v546, %v556
        %v740 = vmax.f32 %v550, %v560
        %v741 = vmax.f32 %v739, %v566
        %v742 = vmax.f32 %v740, %v570
        %v743 = vmax.f32 %v741, %v576
        %v744 = vmax.f32 %v742, %v580
        %v745 = vmax.f32 %v743, %v586
        %v746 = vmax.f32 %v744, %v590
        %v747 = vmax.f32 %v745, %v596
        %v748 = vmax.f32 %v746, %v600
        %v749 = vmax.f32 %v747, %v606
        %v750 = vmax.f32 %v748, %v610
        %v751 = vmax.f32 %v749, %v616
        %v752 = vmax.f32 %v750, %v620
        %v753 = vmax.f32 %v751, %v626
        %v754 = vmax.f32 %v752, %v630
        %v755 = vmax.f32 %v753, %v636
        %v756 = vmax.f32 %v754, %v640
        %v757 = vmax.f32 %v755, %v646
        %v758 = vmax.f32 %v756, %v650
        %v759 = vmax.f32 %v757, %v656
        %v760 = vmax.f32 %v758, %v660
        %v761 = vmax.f32 %v759, %v666
        %v762 = vmax.f32 %v760, %v670
        %v763 = vmax.f32 %v761, %v676
        %v764 = vmax.f32 %v762, %v680
        %v765 = vmax.f32 %v763, %v686
        %v766 = vmax.f32 %v764, %v690
        %v767 = vmax.f32 %v765, %v696
        %v768 = vmax.f32 %v766, %v700
        %v769 = vmax.f32 %v767, %v768
        %v770 = vrot.slane %v769, 4
        %v771 = vmax.f32 %v769, %v770
        %v772 = vrot.slane %v771, 2
        %v773 = vmax.f32 %v771, %v772
        %v774 = vrot.slane %v773, 1
        %v775 = vmax.f32 %v773, %v774
        %v776 = vsub.f32 %v544, %v738
        %v777 = vsub.f32 %v546, %v775
        %v778 = vsub.f32 %v548, %v738
        %v779 = vsub.f32 %v550, %v775
        %v780 = vsub.f32 %v554, %v738
        %v781 = vsub.f32 %v556, %v775
        %v782 = vsub.f32 %v558, %v738
        %v783 = vsub.f32 %v560, %v775
        %v784 = vsub.f32 %v564, %v738
        %v785 = vsub.f32 %v566, %v775
        %v786 = vsub.f32 %v568, %v738
        %v787 = vsub.f32 %v570, %v775
        %v788 = vsub.f32 %v574, %v738
        %v789 = vsub.f32 %v576, %v775
        %v790 = vsub.f32 %v578, %v738
        %v791 = vsub.f32 %v580, %v775
        %v792 = vsub.f32 %v584, %v738
        %v793 = vsub.f32 %v586, %v775
        %v794 = vsub.f32 %v588, %v738
        %v795 = vsub.f32 %v590, %v775
        %v796 = vsub.f32 %v594, %v738
        %v797 = vsub.f32 %v596, %v775
        %v798 = vsub.f32 %v598, %v738
        %v799 = vsub.f32 %v600, %v775
        %v800 = vsub.f32 %v604, %v738
        %v801 = vsub.f32 %v606, %v775
        %v802 = vsub.f32 %v608, %v738
        %v803 = vsub.f32 %v610, %v775
        %v804 = vsub.f32 %v614, %v738
        %v805 = vsub.f32 %v616, %v775
        %v806 = vsub.f32 %v618, %v738
        %v807 = vsub.f32 %v620, %v775
        %v808 = vsub.f32 %v624, %v738
        %v809 = vsub.f32 %v626, %v775
        %v810 = vsub.f32 %v628, %v738
        %v811 = vsub.f32 %v630, %v775
        %v812 = vsub.f32 %v634, %v738
        %v813 = vsub.f32 %v636, %v775
        %v814 = vsub.f32 %v638, %v738
        %v815 = vsub.f32 %v640, %v775
        %v816 = vsub.f32 %v644, %v738
        %v817 = vsub.f32 %v646, %v775
        %v818 = vsub.f32 %v648, %v738
        %v819 = vsub.f32 %v650, %v775
        %v820 = vsub.f32 %v654, %v738
        %v821 = vsub.f32 %v656, %v775
        %v822 = vsub.f32 %v658, %v738
        %v823 = vsub.f32 %v660, %v775
        %v824 = vsub.f32 %v664, %v738
        %v825 = vsub.f32 %v666, %v775
        %v826 = vsub.f32 %v668, %v738
        %v827 = vsub.f32 %v670, %v775
        %v828 = vsub.f32 %v674, %v738
        %v829 = vsub.f32 %v676, %v775
        %v830 = vsub.f32 %v678, %v738
        %v831 = vsub.f32 %v680, %v775
        %v832 = vsub.f32 %v684, %v738
        %v833 = vsub.f32 %v686, %v775
        %v834 = vsub.f32 %v688, %v738
        %v835 = vsub.f32 %v690, %v775
        %v836 = vsub.f32 %v694, %v738
        %v837 = vsub.f32 %v696, %v775
        %v838 = vsub.f32 %v698, %v738
        %v839 = vsub.f32 %v700, %v775
        %v840 = vmul.f32 %v776, 1.442695
        %v841 = vpow.pop %v840
        %v842 = vmul.f32 %v777, 1.442695
        %v843 = vpow.pop %v842
        %v844 = vmul.f32 %v778, 1.442695
        %v845 = vpow.pop %v844
        %v846 = vmul.f32 %v779, 1.442695
        %v847 = vpow.pop %v846
        %v848 = vmul.f32 %v780, 1.442695
        %v849 = vpow.pop %v848
        %v850 = vmul.f32 %v781, 1.442695
        %v851 = vpow.pop %v850
        %v852 = vmul.f32 %v782, 1.442695
        %v853 = vpow.pop %v852
        %v854 = vmul.f32 %v783, 1.442695
        %v855 = vpow.pop %v854
        %v856 = vmul.f32 %v784, 1.442695
        %v857 = vpow.pop %v856
        %v858 = vmul.f32 %v785, 1.442695
        %v859 = vpow.pop %v858
        %v860 = vmul.f32 %v786, 1.442695
        %v861 = vpow.pop %v860
        %v862 = vmul.f32 %v787, 1.442695
        %v863 = vpow.pop %v862
        %v864 = vmul.f32 %v788, 1.442695
        %v865 = vpow.pop %v864
        %v866 = vmul.f32 %v789, 1.442695
        %v867 = vpow.pop %v866
        %v868 = vmul.f32 %v790, 1.442695
        %v869 = vpow.pop %v868
        %v870 = vmul.f32 %v791, 1.442695
        %v871 = vpow.pop %v870
        %v872 = vmul.f32 %v792, 1.442695
        %v873 = vpow.pop %v872
        %v874 = vmul.f32 %v793, 1.442695
        %v875 = vpow.pop %v874
        %v876 = vmul.f32 %v794, 1.442695
        %v877 = vpow.pop %v876
        %v878 = vmul.f32 %v795, 1.442695
        %v879 = vpow.pop %v878
        %v880 = vmul.f32 %v796, 1.442695
        %v881 = vpow.pop %v880
        %v882 = vmul.f32 %v797, 1.442695
        %v883 = vpow.pop %v882
        %v884 = vmul.f32 %v798, 1.442695
        %v885 = vpow.pop %v884
        %v886 = vmul.f32 %v799, 1.442695
        %v887 = vpow.pop %v886
        %v888 = vmul.f32 %v800, 1.442695
        %v889 = vpow.pop %v888
        %v890 = vmul.f32 %v801, 1.442695
        %v891 = vpow.pop %v890
        %v892 = vmul.f32 %v802, 1.442695
        %v893 = vpow.pop %v892
        %v894 = vmul.f32 %v803, 1.442695
        %v895 = vpow.pop %v894
        %v896 = vmul.f32 %v804, 1.442695
        %v897 = vpow.pop %v896
        %v898 = vmul.f32 %v805, 1.442695
        %v899 = vpow.pop %v898
        %v900 = vmul.f32 %v806, 1.442695
        %v901 = vpow.pop %v900
        %v902 = vmul.f32 %v807, 1.442695
        %v903 = vpow.pop %v902
        %v904 = vmul.f32 %v808, 1.442695
        %v905 = vpow.pop %v904
        %v906 = vmul.f32 %v809, 1.442695
        %v907 = vpow.pop %v906
        %v908 = vmul.f32 %v810, 1.442695
        %v909 = vpow.pop %v908
        %v910 = vmul.f32 %v811, 1.442695
        %v911 = vpow.pop %v910
        %v912 = vmul.f32 %v812, 1.442695
        %v913 = vpow.pop %v912
        %v914 = vmul.f32 %v813, 1.442695
        %v915 = vpow.pop %v914
        %v916 = vmul.f32 %v814, 1.442695
        %v917 = vpow.pop %v916
        %v918 = vmul.f32 %v815, 1.442695
        %v919 = vpow.pop %v918
        %v920 = vmul.f32 %v816, 1.442695
        %v921 = vpow.pop %v920
        %v922 = vmul.f32 %v817, 1.442695
        %v923 = vpow.pop %v922
        %v924 = vmul.f32 %v818, 1.442695
        %v925 = vpow.pop %v924
        %v926 = vmul.f32 %v819, 1.442695
        %v927 = vpow.pop %v926
        %v928 = vmul.f32 %v820, 1.442695
        %v929 = vpow.pop %v928
        %v930 = vmul.f32 %v821, 1.442695
        %v931 = vpow.pop %v930
        %v932 = vmul.f32 %v822, 1.442695
        %v933 = vpow.pop %v932
        %v934 = vmul.f32 %v823, 1.442695
        %v935 = vpow.pop %v934
        %v936 = vmul.f32 %v824, 1.442695
        %v937 = vpow.pop %v936
        %v938 = vmul.f32 %v825, 1.442695
        %v939 = vpow.pop %v938
        %v940 = vmul.f32 %v826, 1.442695
        %v941 = vpow.pop %v940
        %v942 = vmul.f32 %v827, 1.442695
        %v943 = vpow.pop %v942
        %v944 = vmul.f32 %v828, 1.442695
        %v945 = vpow.pop %v944
        %v946 = vmul.f32 %v829, 1.442695
        %v947 = vpow.pop %v946
        %v948 = vmul.f32 %v830, 1.442695
        %v949 = vpow.pop %v948
        %v950 = vmul.f32 %v831, 1.442695
        %v951 = vpow.pop %v950
        %v952 = vmul.f32 %v832, 1.442695
        %v953 = vpow.pop %v952
        %v954 = vmul.f32 %v833, 1.442695
        %v955 = vpow.pop %v954
        %v956 = vmul.f32 %v834, 1.442695
        %v957 = vpow.pop %v956
        %v958 = vmul.f32 %v835, 1.442695
        %v959 = vpow.pop %v958
        %v960 = vmul.f32 %v836, 1.442695
        %v961 = vpow.pop %v960
        %v962 = vmul.f32 %v837, 1.442695
        %v963 = vpow.pop %v962
        %v964 = vmul.f32 %v838, 1.442695
        %v965 = vpow.pop %v964
        %v966 = vmul.f32 %v839, 1.442695
        %v967 = vpow.pop %v966
        %v968 = vadd.f32 %v841, %v845
        %v969 = vadd.f32 %v968, %v849
        %v970 = vadd.f32 %v969, %v853
        %v971 = vadd.f32 %v970, %v857
        %v972 = vadd.f32 %v971, %v861
        %v973 = vadd.f32 %v972, %v865
        %v974 = vadd.f32 %v973, %v869
        %v975 = vadd.f32 %v974, %v873
        %v976 = vadd.f32 %v975, %v877
        %v977 = vadd.f32 %v976, %v881
        %v978 = vadd.f32 %v977, %v885
        %v979 = vadd.f32 %v978, %v889
        %v980 = vadd.f32 %v979, %v893
        %v981 = vadd.f32 %v980, %v897
        %v982 = vadd.f32 %v981, %v901
        %v983 = vadd.f32 %v982, %v905
        %v984 = vadd.f32 %v983, %v909
        %v985 = vadd.f32 %v984, %v913
        %v986 = vadd.f32 %v985, %v917
        %v987 = vadd.f32 %v986, %v921
        %v988 = vadd.f32 %v987, %v925
        %v989 = vadd.f32 %v988, %v929
        %v990 = vadd.f32 %v989, %v933
        %v991 = vadd.f32 %v990, %v937
        %v992 = vadd.f32 %v991, %v941
        %v993 = vadd.f32 %v992, %v945
        %v994 = vadd.f32 %v993, %v949
        %v995 = vadd.f32 %v994, %v953
        %v996 = vadd.f32 %v995, %v957
        %v997 = vadd.f32 %v996, %v961
        %v998 = vadd.f32 %v997, %v965
        %v999 = vrot.slane %v998, 4
        %v1000 = vadd.f32 %v998, %v999
        %v1001 = vrot.slane %v1000, 2
        %v1002 = vadd.f32 %v1000, %v1001
        %v1003 = vrot.slane %v1002, 1
        %v1004 = vadd.f32 %v1002, %v1003
        %v1005 = vadd.f32 %v843, %v847
        %v1006 = vadd.f32 %v1005, %v851
        %v1007 = vadd.f32 %v1006, %v855
        %v1008 = vadd.f32 %v1007, %v859
        %v1009 = vadd.f32 %v1008, %v863
        %v1010 = vadd.f32 %v1009, %v867
        %v1011 = vadd.f32 %v1010, %v871
        %v1012 = vadd.f32 %v1011, %v875
        %v1013 = vadd.f32 %v1012, %v879
        %v1014 = vadd.f32 %v1013, %v883
        %v1015 = vadd.f32 %v1014, %v887
        %v1016 = vadd.f32 %v1015, %v891
        %v1017 = vadd.f32 %v1016, %v895
        %v1018 = vadd.f32 %v1017, %v899
        %v1019 = vadd.f32 %v1018, %v903
        %v1020 = vadd.f32 %v1019, %v907
        %v1021 = vadd.f32 %v1020, %v911
        %v1022 = vadd.f32 %v1021, %v915
        %v1023 = vadd.f32 %v1022, %v919
        %v1024 = vadd.f32 %v1023, %v923
        %v1025 = vadd.f32 %v1024, %v927
        %v1026 = vadd.f32 %v1025, %v931
        %v1027 = vadd.f32 %v1026, %v935
        %v1028 = vadd.f32 %v1027, %v939
        %v1029 = vadd.f32 %v1028, %v943
        %v1030 = vadd.f32 %v1029, %v947
        %v1031 = vadd.f32 %v1030, %v951
        %v1032 = vadd.f32 %v1031, %v955
        %v1033 = vadd.f32 %v1032, %v959
        %v1034 = vadd.f32 %v1033, %v963
        %v1035 = vadd.f32 %v1034, %v967
        %v1036 = vrot.slane %v1035, 4
        %v1037 = vadd.f32 %v1035, %v1036
        %v1038 = vrot.slane %v1037, 2
        %v1039 = vadd.f32 %v1037, %v1038
        %v1040 = vrot.slane %v1039, 1
        %v1041 = vadd.f32 %v1039, %v1040
        %v1042 = vld [vmem:[#allocation4] sm:$0xff]
        %v1043 = vld [vmem:[#allocation4 + $0x8] sm:$0xff]
        %v1044 = vpack.c.bf16 %v845, %v841
        %v1045 = vpack.c.bf16 %v847, %v843
        %v1046 = vpack.c.bf16 %v853, %v849
        %v1047 = vpack.c.bf16 %v855, %v851
        %v1048 = vpack.c.bf16 %v861, %v857
        %v1049 = vpack.c.bf16 %v863, %v859
        %v1050 = vpack.c.bf16 %v869, %v865
        %v1051 = vpack.c.bf16 %v871, %v867
        %v1052 = vpack.c.bf16 %v877, %v873
        %v1053 = vpack.c.bf16 %v879, %v875
        %v1054 = vpack.c.bf16 %v885, %v881
        %v1055 = vpack.c.bf16 %v887, %v883
        %v1056 = vpack.c.bf16 %v893, %v889
        %v1057 = vpack.c.bf16 %v895, %v891
        %v1058 = vpack.c.bf16 %v901, %v897
        %v1059 = vpack.c.bf16 %v903, %v899
        %v1060 = vpack.c.bf16 %v909, %v905
        %v1061 = vpack.c.bf16 %v911, %v907
        %v1062 = vpack.c.bf16 %v917, %v913
        %v1063 = vpack.c.bf16 %v919, %v915
        %v1064 = vpack.c.bf16 %v925, %v921
        %v1065 = vpack.c.bf16 %v927, %v923
        %v1066 = vpack.c.bf16 %v933, %v929
        %v1067 = vpack.c.bf16 %v935, %v931
        %v1068 = vpack.c.bf16 %v941, %v937
        %v1069 = vpack.c.bf16 %v943, %v939
        %v1070 = vpack.c.bf16 %v949, %v945
        %v1071 = vpack.c.bf16 %v951, %v947
        %v1072 = vpack.c.bf16 %v957, %v953
        %v1073 = vpack.c.bf16 %v959, %v955
        %v1074 = vpack.c.bf16 %v965, %v961
        %v1075 = vpack.c.bf16 %v967, %v963
        %v1078 = vunpack.c.l.b16 %v1042
        %v1079 = vunpack.c.h.b16 %v1042
        %v1080 = vunpack.c.l.b16 %v1043
        %v1081 = vunpack.c.h.b16 %v1043
        %v1082 = vpack.c.b16 %v1080, %v1078
        %v1083 = vpack.c.b16 %v1081, %v1079
        %1086 = vmatprep.subr.bf16.mxu0 %v1059
        %1087 = vmatpush1.bf16.msra.mxu0 %v1058
        %1088 = vmatprep.subr.bf16.mxu0 %v1057
        %1089 = vmatpush1.bf16.msra.mxu0 %v1056
        %1090 = vmatprep.subr.bf16.mxu0 %v1055
        %1091 = vmatpush1.bf16.msra.mxu0 %v1054
        %1092 = vmatprep.subr.bf16.mxu0 %v1053
        %1093 = vmatpush1.bf16.msra.mxu0 %v1052
        %1094 = vmatprep.subr.bf16.mxu0 %v1051
        %1095 = vmatpush1.bf16.msra.mxu0 %v1050
        %1096 = vmatprep.subr.bf16.mxu0 %v1049
        %1097 = vmatpush1.bf16.msra.mxu0 %v1048
        %1098 = vmatprep.subr.bf16.mxu0 %v1047
        %1099 = vmatpush1.bf16.msra.mxu0 %v1046
        %1100 = vmatprep.subr.bf16.mxu0 %v1045
        %1101 = vmatpush1.bf16.msra.mxu0 %v1044
        %1102 = vmatprep.subr.bf16.mxu0 %v1075
        %1103 = vmatpush2.bf16.msra.mxu0 %v1074
        %1104 = vmatprep.subr.bf16.mxu0 %v1073
        %1105 = vmatpush2.bf16.msra.mxu0 %v1072
        %1106 = vmatprep.subr.bf16.mxu0 %v1071
        %1107 = vmatpush2.bf16.msra.mxu0 %v1070
        %1108 = vmatprep.subr.bf16.mxu0 %v1069
        %1109 = vmatpush2.bf16.msra.mxu0 %v1068
        %1110 = vmatprep.subr.bf16.mxu0 %v1067
        %1111 = vmatpush2.bf16.msra.mxu0 %v1066
        %1112 = vmatprep.subr.bf16.mxu0 %v1065
        %1113 = vmatpush2.bf16.msra.mxu0 %v1064
        %1114 = vmatprep.subr.bf16.mxu0 %v1063
        %1115 = vmatpush2.bf16.msra.mxu0 %v1062
        %1116 = vmatprep.subr.bf16.mxu0 %v1061
        %1117 = vmatpush2.bf16.msra.mxu0 %v1060
        %1118 = vmatprep.mubr.bf16.mxu0 %v1083
        %1119 = vmatmul.mubr.bf16.gmra.mxu0 %v1082
        %v1120 = vpop.f32.mrf.mxu0
        %v1121 = vadd.f32 0.0, %v1120
        %v1122 = vpop.f32.mrf.mxu0
        %v1123 = vadd.f32 0.0, %v1122
        %v1124 = vpop.f32.mrf.mxu0
        %v1125 = vpop.f32.mrf.mxu0
        %1126 = vdwg.mxu0
        %v1127 = vrcp.pop %v1004
        %v1128 = vrcp.pop %v1041
        %v1129 = vmul.f32 %v1121, %v1127
        %v1130 = vmul.f32 %v1123, %v1128
        %v1131 = vmul.f32 %v1129, %v400
        %v1132 = vmul.f32 %v1130, %v401
        %1133 = vst [vmem:[%s177] sm:$0xff] %v1131
        %1134 = vst [vmem:[%s177 + $0x8] sm:$0xff] %v1132
        %s1135 = sand.u32 %s107, 1
        %s1136 = scalar_lea.sflag [#allocation6], %s1135
        %s1137 = sand.u32 %s107, 1
        %s1138 = smul.addr %s1137, 16
        %s1139 = scalar_lea.vmem [#allocation5], %s1138
        // Predicated region
        $region37: #{tpu_custom_call.1} parent=31 // pred_check
          %p1140 = pneg %p117
        $region38: #{tpu_custom_call.1} parent=31 // pred_check_branch
          %1142 = sbr.rel (%p1140) target = $region40
        $region39: #{tpu_custom_call.1} parent=31 // pred_region
          %s1143 = smul.u32 2, %s22
          %s1145 = ssub.s32 256, 256
          %1146 = vsyncadd %s1136, %s1145
          %s1147 = smul.addr %s21, 2
          %s1148 = sadd.s32 %s1143, %s1147
          %s1149 = smul.addr %s1148, 128
          %s1150 = scalar_lea.hbm %s3, %s1149
          %s1152 = sshll.u32 %s1139, 4
          %s1153 = int_to_ptr.vmem [resolvable:$true] %s1152
          %1155 = dma.vmem_to_hbm [thread:$0]  %s1153, 256, %s1150, %s1136
        $region40: #{tpu_custom_call.1} parent=31 // pred_fallthru
          _
      $region32: #{tpu_custom_call.1} parent=5 // pred_fallthru
        _
      %p1156 = scmp.le.s32.totalorder 2, %s12
      // Predicated region
      $region41: #{tpu_custom_call.1} parent=5 // pred_check
        %p1157 = pneg %p1156
      $region42: #{tpu_custom_call.1} parent=5 // pred_check_branch
        %1159 = sbr.rel (%p1157) target = $region44
      $region43: #{tpu_custom_call.1} parent=5 // pred_region
        %s1160 = ssub.s32 %s12, 2
        // Predicated region
        $region45: #{tpu_custom_call.1} parent=43 // pred_check
          %p1161 = pneg %p123
        $region46: #{tpu_custom_call.1} parent=43 // pred_check_branch
          %1163 = sbr.rel (%p1161) target = $region48
        $region47: #{tpu_custom_call.1} parent=43 // pred_region
          %s1164 = sand.u32 %s108, 1
          %s1165 = scalar_lea.sflag [#allocation6], %s1164
          %s1166 = sand.u32 %s108, 1
          %s1167 = smul.addr %s1166, 16
          %s1168 = scalar_lea.vmem [#allocation5], %s1167
          %1169 = dma.done %s1165, 256
        $region48: #{tpu_custom_call.1} parent=43 // pred_fallthru
          _
      $region44: #{tpu_custom_call.1} parent=5 // pred_fallthru
        _
    $region6: #{tpu_custom_call.1} parent=1 // loop_footer
      %s16 = sadd.s32 1, %s12
    $region7: #{tpu_custom_call.1} parent=1 // loop_footer_branch
      %11 = sbr.rel target = $region3
    $region8: #{tpu_custom_call.1} parent=1 // loop_exit
      _
    %1170 = vsyncpa [#allocation6], 1
    %s1171 = scalar_lea.sflag [#allocation6], 1
    %1172 = vsyncpa %s1171, 1

</llo_original>
